<compile_context>
chip_gen: v7x
topology: tpu7x:2x2x1
jax: 0.10.0
libtpu: 0.0.40
codegen_flags: <defaults>
</compile_context>

<pallas_src>
import functools

import jax
import jax.numpy as jnp
from jax.experimental import pallas as pl
from jax.experimental.pallas import tpu as pltpu


# --------------------------------------------------------------------------
# helpers
# --------------------------------------------------------------------------

def _sublane_multiple(dtype):
    itemsize = jnp.dtype(dtype).itemsize
    if itemsize >= 4:
        return 8
    if itemsize == 2:
        return 16
    return 32


def _round_up(x, m):
    return ((x + m - 1) // m) * m


def _vmem_capacity_bytes():
    try:
        return int(pltpu.get_tpu_info().vmem_capacity_bytes)
    except Exception:
        return 64 * 1024 * 1024  # conservative (v7x per-TC VMEM)


def _footprint_bytes(tile_n, d, itemsize):
    # 2x double-buffered input + 2x double-buffered output + ~2 f32 temporaries.
    block = tile_n * d * itemsize
    f32_tmp = tile_n * d * 4
    return 4 * block + 2 * f32_tmp


def _canonicalize_power(power):
    if isinstance(power, int):
        return power
    p_f = float(power)
    return int(p_f) if p_f.is_integer() else p_f


# --------------------------------------------------------------------------
# single-pass kernels (whole feature dim D inside one block)
# --------------------------------------------------------------------------

def _normalize_p2_kernel(x_ref, o_ref, *, scale_native):
    x = x_ref[...]
    xf = x.astype(jnp.float32)
    sumsq = jnp.sum(xf * xf, axis=1, keepdims=True)      # reduction stays f32
    inv_norm = jax.lax.rsqrt(sumsq)                       # EUP, no VALU divide
    if scale_native:
        o_ref[...] = x * inv_norm.astype(x.dtype)         # bf16 scale pass
    else:
        o_ref[...] = (xf * inv_norm).astype(o_ref.dtype)


def _normalize_gen_kernel(x_ref, o_ref, *, power, scale_native):
    x = x_ref[...]
    xf = x.astype(jnp.float32)
    s = jnp.sum(xf ** power, axis=1, keepdims=True)       # int power -> integer_pow
    inv_norm = s ** jnp.float32(-1.0 / power)              # one pow, no reciprocal
    if scale_native:
        o_ref[...] = x * inv_norm.astype(x.dtype)
    else:
        o_ref[...] = (xf * inv_norm).astype(o_ref.dtype)


# --------------------------------------------------------------------------
# two-pass kernels (D split across a second grid axis) for very large D
# --------------------------------------------------------------------------

def _rowsum_kernel(x_ref, s_ref, *, power, d_total, tile_d):
    j = pl.program_id(1)

    @pl.when(j == 0)
    def _():
        s_ref[...] = jnp.zeros_like(s_ref)

    xf = x_ref[...].astype(jnp.float32)
    if d_total % tile_d != 0:
        # Mask lanes past the true feature dim (partial last D tile).
        lane = jax.lax.broadcasted_iota(jnp.int32, xf.shape, 1) + j * tile_d
        xf = jnp.where(lane < d_total, xf, 0.0)
    if power == 2:
        s_ref[...] += jnp.sum(xf * xf, axis=1, keepdims=True)
    else:
        s_ref[...] += jnp.sum(xf ** power, axis=1, keepdims=True)


def _scale_kernel(x_ref, s_ref, o_ref, *, power, scale_native):
    s = s_ref[...]
    if power == 2:
        inv_norm = jax.lax.rsqrt(s)
    else:
        inv_norm = s ** jnp.float32(-1.0 / power)
    x = x_ref[...]
    if scale_native:
        o_ref[...] = x * inv_norm.astype(x.dtype)
    else:
        o_ref[...] = (x.astype(jnp.float32) * inv_norm).astype(o_ref.dtype)


def _normalize_two_pass(x, power, *, sub, itemsize, tile_d,
                        block_bytes_budget, vmem_ceiling, scale_native):
    n, d = x.shape
    tile_n = n if n <= sub else sub
    if tile_d is None:
        tile_d = max(128, (block_bytes_budget // max(1, tile_n * itemsize)) // 128 * 128)
    tile_d = min(tile_d, _round_up(d, 128))
    grid_n = pl.cdiv(n, tile_n)
    grid_d = pl.cdiv(d, tile_d)

    cparams_acc = pltpu.CompilerParams(
        dimension_semantics=("parallel", "arbitrary"),
        vmem_limit_bytes=int(vmem_ceiling))
    cparams_par = pltpu.CompilerParams(
        dimension_semantics=("parallel", "parallel"),
        vmem_limit_bytes=int(vmem_ceiling))

    # Pass 1: per-row sum(x^p), accumulated over the D grid axis.
    sums = pl.pallas_call(
        functools.partial(_rowsum_kernel, power=power, d_total=d, tile_d=tile_d),
        out_shape=jax.ShapeDtypeStruct((n, 1), jnp.float32),
        grid_spec=pltpu.PrefetchScalarGridSpec(
            num_scalar_prefetch=0,
            grid=(grid_n, grid_d),
            in_specs=[pl.BlockSpec((tile_n, tile_d), lambda i, j: (i, j))],
            out_specs=pl.BlockSpec((tile_n, 1), lambda i, j: (i, 0)),
        ),
        compiler_params=cparams_acc,
    )(x)

    # Pass 2: rescale each (row, D-tile) block by norm^-1.
    return pl.pallas_call(
        functools.partial(_scale_kernel, power=power, scale_native=scale_native),
        out_shape=jax.ShapeDtypeStruct((n, d), x.dtype),
        grid_spec=pltpu.PrefetchScalarGridSpec(
            num_scalar_prefetch=0,
            grid=(grid_n, grid_d),
            in_specs=[pl.BlockSpec((tile_n, tile_d), lambda i, j: (i, j)),
                      pl.BlockSpec((tile_n, 1), lambda i, j: (i, 0))],
            out_specs=pl.BlockSpec((tile_n, tile_d), lambda i, j: (i, j)),
        ),
        compiler_params=cparams_par,
    )(x, sums)


# --------------------------------------------------------------------------
# small-D fallback (plain XLA)
# --------------------------------------------------------------------------

def _normalize_xla(x, power):
    xf = x.astype(jnp.float32)
    norm = jnp.power(jnp.sum(xf ** power, axis=1, keepdims=True), 1.0 / power)
    return (xf / norm).astype(x.dtype)


# --------------------------------------------------------------------------
# public wrapper
# --------------------------------------------------------------------------

def normalize(x, power=2, *, tile_n=None, tile_d=None,
              block_bytes_budget=None, force_two_pass=False):
    """Lp-normalize each row of x (shape (N, D)) over the feature axis."""
    if x.ndim != 2:
        raise ValueError("normalize expects a 2-D (N, D) input")
    n, d = x.shape
    dtype = jnp.dtype(x.dtype)
    itemsize = dtype.itemsize
    sub = _sublane_multiple(dtype)
    power = _canonicalize_power(power)

    # D < 128: masked partial lane stores dominate -> plain XLA is faster.
    # TODO(synk): lane-dense relayout (fold 128//D rows per vreg row) instead.
    if d < 128:
        return _normalize_xla(x, power)

    # Final scale multiply in the native dtype for 2-byte floats (reduction
    # stays f32).  TODO(synk): keep f32 scale path on v5e (no bf16 VPU there).
    scale_native = (itemsize == 2)

    # Generation-aware budgets.
    vmem_cap = _vmem_capacity_bytes()
    small_vmem = vmem_cap <= 64 * 1024 * 1024            # v7x-like per-TC VMEM
    if block_bytes_budget is None:
        block_bytes_budget = (3 if small_vmem else 8) * 1024 * 1024
    vmem_ceiling = (48 if small_vmem else 100) * 1024 * 1024

    # If even a minimal (sub, D) row tile blows the block budget, split D.
    if force_two_pass or sub * d * itemsize > block_bytes_budget:
        return _normalize_two_pass(
            x, power, sub=sub, itemsize=itemsize, tile_d=tile_d,
            block_bytes_budget=block_bytes_budget, vmem_ceiling=vmem_ceiling,
            scale_native=scale_native)

    # ---- single-pass path: whole feature dim D in one block ----
    if n <= sub:
        tile_n = n                    # full-extent row block (tiny batch)
    else:
        if tile_n is None:
            budget_rows = block_bytes_budget // max(1, d * itemsize)
            tile_n = max(budget_rows, sub)                       # no fixed row cap
            # >= 2 grid steps where possible so both v7x TCs get work.
            tile_n = min(tile_n, _round_up(pl.cdiv(n, 2), sub))
        tile_n = max(sub, (tile_n // sub) * sub)                 # sublane multiple
        # Keep pipelined footprint under the per-generation VMEM ceiling.
        while tile_n > sub and _footprint_bytes(tile_n, d, itemsize) > vmem_ceiling:
            tile_n = max(sub, ((tile_n // 2) // sub) * sub)

    grid_n = pl.cdiv(n, tile_n)
    # Even block count => equal split across v7x's two TensorCores.
    if grid_n > 1 and grid_n % 2 == 1:
        alt = max(sub, _round_up(pl.cdiv(n, grid_n + 1), sub))
        if pl.cdiv(n, alt) % 2 == 0:
            tile_n = alt
            grid_n = pl.cdiv(n, alt)

    if power == 2:
        kernel = functools.partial(_normalize_p2_kernel, scale_native=scale_native)
    else:
        kernel = functools.partial(_normalize_gen_kernel, power=power,
                                   scale_native=scale_native)

    return pl.pallas_call(
        kernel,
        out_shape=jax.ShapeDtypeStruct((n, d), x.dtype),
        grid_spec=pltpu.PrefetchScalarGridSpec(
            num_scalar_prefetch=0,
            grid=(grid_n,),
            in_specs=[pl.BlockSpec((tile_n, d), lambda i: (i, 0))],
            out_specs=pl.BlockSpec((tile_n, d), lambda i: (i, 0)),
        ),
        compiler_params=pltpu.CompilerParams(
            dimension_semantics=("parallel",),
            vmem_limit_bytes=int(vmem_ceiling),
        ),
    )(x)


def normalize_ref(x, power=2):
    # Pure-JAX reference mirroring the PyTorch forward exactly.
    norm = jnp.power(jnp.sum(jnp.power(x, power), axis=1, keepdims=True),
                     1.0 / power)
    return x / norm


if __name__ == "__main__":
    key = jax.random.PRNGKey(0)

    # Primary example: batch=32 feature vectors of hidden=128 (lane-dense).
    x = jax.random.normal(key, (32, 128), dtype=jnp.float32)
    out = jax.block_until_ready(normalize(x, power=2))
    ref = normalize_ref(x, power=2)
    assert out.shape == x.shape and out.dtype == x.dtype
    assert jnp.allclose(out, ref, atol=1e-5, rtol=1e-5), "p=2 mismatch"

    # Non-divisible batch (exercises the masked partial last row block).
    x2 = jax.random.normal(jax.random.PRNGKey(1), (20, 128), dtype=jnp.float32)
    out2 = jax.block_until_ready(normalize(x2, power=2))
    assert jnp.allclose(out2, normalize_ref(x2, power=2),
                        atol=1e-5, rtol=1e-5), "partial-block mismatch"

    # Small-D case + general-power path (falls back to XLA by design).
    x3 = jax.random.normal(jax.random.PRNGKey(2), (8, 32), dtype=jnp.float32)
    out3 = jax.block_until_ready(normalize(x3, power=4))
    assert jnp.allclose(out3, normalize_ref(x3, power=4),
                        atol=1e-5, rtol=1e-5), "p=4 mismatch"

    # Two-pass D-split path (forced at a small shape; D tail masked).
    x4 = jax.random.normal(jax.random.PRNGKey(3), (16, 320), dtype=jnp.float32)
    out4 = jax.block_until_ready(
        normalize(x4, power=2, force_two_pass=True, tile_d=128))
    assert jnp.allclose(out4, normalize_ref(x4, power=2),
                        atol=1e-5, rtol=1e-5), "two-pass mismatch"

    # bf16 path (native-dtype scale multiply, f32 reduction).
    x5 = jax.random.normal(jax.random.PRNGKey(4), (32, 256),
                           dtype=jnp.float32).astype(jnp.bfloat16)
    out5 = jax.block_until_ready(normalize(x5, power=2))
    ref5 = normalize_ref(x5.astype(jnp.float32), power=2)
    assert out5.dtype == jnp.bfloat16
    assert jnp.allclose(out5.astype(jnp.float32), ref5,
                        atol=3e-2, rtol=3e-2), "bf16 mismatch"

    print("KERNEL_OK")
</pallas_src>

<mosaic_0001>
module attributes {stable_mosaic.version = 11 : i64} {
  func.func @_normalize_p2_kernel(%arg0: i32, %arg1: memref<16x128xf32, #tpu.memory_space<vmem>>, %arg2: memref<16x128xf32, #tpu.memory_space<vmem>>) attributes {dimension_semantics = [#tpu.dimension_semantics<parallel>], iteration_bounds = array<i64: 2>, scalar_prefetch = 0 : i64, scratch_operands = 0 : i64, tpu.core_type = #tpu.core_type<tc>, window_params = [{transform_indices = @transform_0, window_bounds = array<i64: 16, 128>}, {transform_indices = @transform_1, window_bounds = array<i64: 16, 128>}]} {
    %c0 = arith.constant 0 : index
    %c0_0 = arith.constant 0 : index
    %0 = vector.load %arg1[%c0, %c0_0] : memref<16x128xf32, #tpu.memory_space<vmem>>, vector<16x128xf32>
    %1 = arith.mulf %0, %0 : vector<16x128xf32>
    %cst = arith.constant dense<0.000000e+00> : vector<16xf32>
    %2 = vector.multi_reduction <add>, %1, %cst [1] : vector<16x128xf32> to vector<16xf32>
    %3 = vector.shape_cast %2 : vector<16xf32> to vector<16x1xf32>
    %4 = math.rsqrt %3 : vector<16x1xf32>
    %5 = vector.broadcast %4 : vector<16x1xf32> to vector<16x128xf32>
    %6 = arith.mulf %0, %5 : vector<16x128xf32>
    %c0_1 = arith.constant 0 : index
    %c0_2 = arith.constant 0 : index
    %7 = vector.load %arg2[%c0_1, %c0_2] : memref<16x128xf32, #tpu.memory_space<vmem>>, vector<16x128xf32>
    tpu.vector_store %arg2[%c0_1, %c0_2], %6 {strides = array<i32>} : memref<16x128xf32, #tpu.memory_space<vmem>>, vector<16x128xf32>,
    return
  }
  func.func @transform_0(%arg0: i32) -> (i32, i32) {
    %c0_i32 = arith.constant 0 : i32
    %c0_i32_0 = arith.constant 0 : i32
    return %arg0, %c0_i32 : i32, i32
  }
  func.func @transform_1(%arg0: i32) -> (i32, i32) {
    %c0_i32 = arith.constant 0 : i32
    %c0_i32_0 = arith.constant 0 : i32
    return %arg0, %c0_i32 : i32, i32
  }
}

</mosaic_0001>

<llo_original>
// kernel: tpu_custom_call.1
$region0: #{tpu_custom_call.1}
  #allocation0 [shape = 'u32[]', space=smem, size = 0x4, offset = 0x4, fixed_abs, tag = 'smem constant byte address 0x4 - core index']
  #allocation1 [shape = 'u32[144,128]{1,0:T(1,128)}', space=vmem, size = 0x12000, scoped, tag = 'internal scratch']
  %s0 = inlined_call_operand.hbm [shape: f32[32,128], index: 0, kind: input, shape index: {}]
  %s1 = inlined_call_operand.hbm [shape: f32[32,128], index: 1, kind: output, shape index: {}]
  %s2 = sld [smem:[#allocation0]]
  $region41: #{tpu_custom_call.1} parent=0
    _
  %s4 = ssub.s32 1, %s2
  %s5 = scalar_select 0, %s4, %s2
  $region1: #{tpu_custom_call.1} parent=0
    #allocation2 [shape = 'u8[16384]{0}', space=vmem, size = 0x4000, scoped, tag = 'input window, operand 0']
    #allocation3 [shape = 's32[2]{0}', space=sflag, size = 0x8, scoped, tag = 'scoped memory for tpu_custom_call.1']
    #allocation4 [shape = 's32[2]{0}', space=sflag, size = 0x8, scoped, tag = 'scoped memory for tpu_custom_call.1']
    #allocation5 [shape = 'u8[16384]{0}', space=vmem, size = 0x4000, scoped, tag = 'output window, operand 0']
    %6 = vsyncpa [#allocation3], 0
    %s7 = scalar_lea.sflag [#allocation3], 1
    %8 = vsyncpa %s7, 0
    %9 = vsyncpa [#allocation4], 0
    %s10 = scalar_lea.sflag [#allocation4], 1
    %11 = vsyncpa %s10, 0
    loop: start=0, step=1, limit=4
    $region2: #{tpu_custom_call.1} parent=1 // loop_pre_header
      _
    $region3: #{tpu_custom_call.1} parent=1 // loop_header
      %s13 = sphi 0, %s17
      %p14 = scmp.ge.s32.totalorder %s13, 4
      %s23 = sphi 0, %s25
      %s26 = sphi 0, %s23
      %s27 = sphi 0, %s26
      %s43 = sphi 0, %s27
      %s49 = sphi 0, %s51
      %s52 = sphi 0, %s49
      %s53 = sphi 0, %s52
      %s69 = sphi 0, %s53
    $region4: #{tpu_custom_call.1} parent=1 // loop_header_branch
      %16 = sbr.rel (%p14) target = $region8
    $region5: #{tpu_custom_call.1} parent=1 // loop_body
      %s18 = ssub.s32 %s13, 1
      %s19 = ssub.s32 %s13, 2
      %s20 = sadd.s32 %s13, 1
      %s21 = ssub.s32 %s13, %s20
      %p22 = scmp.eq.s32.totalorder %s21, 0
      %s24 = sadd.s32 %s23, 1
      %s25 = scalar_select %p22, %s23, %s24
      %p28 = pneg %p22
      %p29 = scmp.eq.s32.totalorder %s13, 1
      %p30 = por %p28, %p29
      %p31 = scmp.ne.s32.totalorder %s23, %s26
      %p32 = scmp.eq.s32.totalorder %s13, 0
      %p33 = por %p31, %p32
      %p34 = scmp.ne.s32.totalorder %s23, %s26
      %p35 = scmp.eq.s32.totalorder %s18, 1
      %p36 = por %p34, %p35
      %p37 = scmp.ne.s32.totalorder %s26, %s27
      %p38 = scmp.eq.s32.totalorder %s18, 0
      %p39 = por %p37, %p38
      %p40 = scmp.ne.s32.totalorder %s26, %s27
      %p41 = scmp.eq.s32.totalorder %s19, 1
      %p42 = por %p40, %p41
      %p44 = scmp.ne.s32.totalorder %s27, %s43
      %p45 = scmp.eq.s32.totalorder %s19, 0
      %p46 = por %p44, %p45
      %s47 = ssub.s32 %s13, %s20
      %p48 = scmp.eq.s32.totalorder %s47, 0
      %s50 = sadd.s32 %s49, 1
      %s51 = scalar_select %p48, %s49, %s50
      %p54 = pneg %p48
      %p55 = scmp.eq.s32.totalorder %s13, 1
      %p56 = por %p54, %p55
      %p57 = scmp.ne.s32.totalorder %s49, %s52
      %p58 = scmp.eq.s32.totalorder %s13, 0
      %p59 = por %p57, %p58
      %p60 = scmp.ne.s32.totalorder %s49, %s52
      %p61 = scmp.eq.s32.totalorder %s18, 1
      %p62 = por %p60, %p61
      %p63 = scmp.ne.s32.totalorder %s52, %s53
      %p64 = scmp.eq.s32.totalorder %s18, 0
      %p65 = por %p63, %p64
      %p66 = scmp.ne.s32.totalorder %s52, %s53
      %p67 = scmp.eq.s32.totalorder %s19, 1
      %p68 = por %p66, %p67
      %p70 = scmp.ne.s32.totalorder %s53, %s69
      %p71 = scmp.eq.s32.totalorder %s19, 0
      %p72 = por %p70, %p71
      %p73 = scmp.le.s32.totalorder 1, %s13
      %p74 = scmp.lt.s32.totalorder %s13, 3
      %p75 = pnand %p73, %p74
      %p76 = pneg %p75
      // Predicated region
      $region9: #{tpu_custom_call.1} parent=5 // pred_check
        _
      $region10: #{tpu_custom_call.1} parent=5 // pred_check_branch
        %78 = sbr.rel (%p75) target = $region12
      $region11: #{tpu_custom_call.1} parent=5 // pred_region
        %s79 = ssub.s32 %s13, 1
      $region12: #{tpu_custom_call.1} parent=5 // pred_fallthru
        _
      %p80 = scmp.lt.s32.totalorder %s13, 2
      // Predicated region
      $region13: #{tpu_custom_call.1} parent=5 // pred_check
        %p81 = pneg %p80
      $region14: #{tpu_custom_call.1} parent=5 // pred_check_branch
        %83 = sbr.rel (%p81) target = $region16
      $region15: #{tpu_custom_call.1} parent=5 // pred_region
        // Predicated region
        $region17: #{tpu_custom_call.1} parent=15 // pred_check
          %p84 = pneg %p33
        $region18: #{tpu_custom_call.1} parent=15 // pred_check_branch
          %86 = sbr.rel (%p84) target = $region20
        $region19: #{tpu_custom_call.1} parent=15 // pred_region
          %s87 = sand.u32 %s23, 1
          %s88 = scalar_lea.sflag [#allocation3], %s87
          %s89 = sand.u32 %s23, 1
          %s90 = smul.addr %s89, 16
          %s91 = scalar_lea.vmem [#allocation2], %s90
          %s92 = smul.u32 2, %s13
          %s94 = ssub.s32 256, 256
          %95 = vsyncadd %s88, %s94
          %s96 = smul.addr %s92, 128
          %s97 = scalar_lea.hbm %s0, %s96
          %s98 = sshll.u32 %s91, 4
          %s99 = int_to_ptr.vmem [resolvable:$true] %s98
          %104 = dma.hbm_to_vmem [thread:$0]  %s97, 256, %s99, %s88, 128, 128, 8
        $region20: #{tpu_custom_call.1} parent=15 // pred_fallthru
          _
      $region16: #{tpu_custom_call.1} parent=5 // pred_fallthru
        _
      %p105 = scmp.le.s32.totalorder 1, %s13
      %p106 = scmp.lt.s32.totalorder %s13, 3
      %p107 = pnand %p105, %p106
      %p108 = pneg %p107
      // Predicated region
      $region21: #{tpu_custom_call.1} parent=5 // pred_check
        _
      $region22: #{tpu_custom_call.1} parent=5 // pred_check_branch
        %110 = sbr.rel (%p107) target = $region24
      $region23: #{tpu_custom_call.1} parent=5 // pred_region
        %s111 = ssub.s32 %s13, 1
        %s112 = sand.u32 %s26, 1
        %s113 = scalar_lea.sflag [#allocation3], %s112
        %s114 = sand.u32 %s26, 1
        %s115 = smul.addr %s114, 16
        %s116 = scalar_lea.vmem [#allocation2], %s115
        // Predicated region
        $region25: #{tpu_custom_call.1} parent=23 // pred_check
          %p117 = pneg %p39
        $region26: #{tpu_custom_call.1} parent=23 // pred_check_branch
          %119 = sbr.rel (%p117) target = $region28
        $region27: #{tpu_custom_call.1} parent=23 // pred_region
          %120 = dma.done %s113, 256
        $region28: #{tpu_custom_call.1} parent=23 // pred_fallthru
          _
        %s121 = sand.u32 %s26, 1
        %s122 = scalar_lea.sflag [#allocation3], %s121
        %s123 = sand.u32 %s26, 1
        %s124 = smul.addr %s123, 16
        %s125 = scalar_lea.vmem [#allocation2], %s124
        %p126 = pneg %p39
        %p127 = pneg %p36
        %p128 = pneg %p65
        %p129 = pneg %p62
        %s130 = sand.u32 %s52, 1
        %s131 = scalar_lea.sflag [#allocation4], %s130
        %s132 = sand.u32 %s52, 1
        %s133 = smul.addr %s132, 16
        %s134 = scalar_lea.vmem [#allocation5], %s133
        %s135 = smul.u32 2, %s18
        %s136 = smul.u32 2, %s18
        %v137 = vld [vmem:[%s116] sm:$0xff]
        %v138 = vld [vmem:[%s116 + $0x8] sm:$0xff]
        %v139 = vmul.f32 %v137, %v137
        %v140 = vmul.f32 %v138, %v138
        %141 = vadd.xlane.f32.xlu0 %v139
        %v142 = vpop.xlane.xlu0 %141
        %143 = vadd.xlane.f32.xlu0 %v140
        %v144 = vpop.xlane.xlu0 %143
        %v145 = vrsqrt.pop %v142
        %v146 = vrsqrt.pop %v144
        %v147 = vmul.f32 %v137, %v145
        %v148 = vmul.f32 %v138, %v146
        %149 = vst [vmem:[%s134] sm:$0xff] %v147
        %150 = vst [vmem:[%s134 + $0x8] sm:$0xff] %v148
        %s151 = sand.u32 %s52, 1
        %s152 = scalar_lea.sflag [#allocation4], %s151
        %s153 = sand.u32 %s52, 1
        %s154 = smul.addr %s153, 16
        %s155 = scalar_lea.vmem [#allocation5], %s154
        // Predicated region
        $region29: #{tpu_custom_call.1} parent=23 // pred_check
          %p156 = pneg %p62
        $region30: #{tpu_custom_call.1} parent=23 // pred_check_branch
          %158 = sbr.rel (%p156) target = $region32
        $region31: #{tpu_custom_call.1} parent=23 // pred_region
          %s159 = smul.u32 2, %s18
          %s161 = ssub.s32 256, 256
          %162 = vsyncadd %s152, %s161
          %s163 = smul.addr %s159, 128
          %s164 = scalar_lea.hbm %s1, %s163
          %s165 = sshll.u32 %s155, 4
          %s166 = int_to_ptr.vmem [resolvable:$true] %s165
          %171 = dma.vmem_to_hbm [thread:$0]  %s166, 256, %s164, %s152, 128, 128, 8
        $region32: #{tpu_custom_call.1} parent=23 // pred_fallthru
          _
      $region24: #{tpu_custom_call.1} parent=5 // pred_fallthru
        _
      %p172 = scmp.le.s32.totalorder 2, %s13
      // Predicated region
      $region33: #{tpu_custom_call.1} parent=5 // pred_check
        %p173 = pneg %p172
      $region34: #{tpu_custom_call.1} parent=5 // pred_check_branch
        %175 = sbr.rel (%p173) target = $region36
      $region35: #{tpu_custom_call.1} parent=5 // pred_region
        %s176 = ssub.s32 %s13, 2
        // Predicated region
        $region37: #{tpu_custom_call.1} parent=35 // pred_check
          %p177 = pneg %p68
        $region38: #{tpu_custom_call.1} parent=35 // pred_check_branch
          %179 = sbr.rel (%p177) target = $region40
        $region39: #{tpu_custom_call.1} parent=35 // pred_region
          %s180 = sand.u32 %s53, 1
          %s181 = scalar_lea.sflag [#allocation4], %s180
          %s182 = sand.u32 %s53, 1
          %s183 = smul.addr %s182, 16
          %s184 = scalar_lea.vmem [#allocation5], %s183
          %185 = dma.done %s181, 256
        $region40: #{tpu_custom_call.1} parent=35 // pred_fallthru
          _
      $region36: #{tpu_custom_call.1} parent=5 // pred_fallthru
        _
    $region6: #{tpu_custom_call.1} parent=1 // loop_footer
      %s17 = sadd.s32 1, %s13
    $region7: #{tpu_custom_call.1} parent=1 // loop_footer_branch
      %12 = sbr.rel target = $region3
    $region8: #{tpu_custom_call.1} parent=1 // loop_exit
      _
    %186 = vsyncpa [#allocation3], 1
    %s187 = scalar_lea.sflag [#allocation3], 1
    %188 = vsyncpa %s187, 1
    %189 = vsyncpa [#allocation4], 1
    %s190 = scalar_lea.sflag [#allocation4], 1
    %191 = vsyncpa %s190, 1

</llo_original>
